<compile_context>
chip_gen: v7x
topology: tpu7x:2x2x1
jax: 0.10.0
libtpu: 0.0.40
codegen_flags: <defaults>
</compile_context>

<pallas_src>
import functools
import math

import jax
import jax.numpy as jnp
import numpy as np
from jax.experimental import pallas as pl
from jax.experimental.pallas import tpu as pltpu

LANE = 128
MAX_BLOCK_ROWS = 1024   # 1024 x 128 f32 = 512 KiB per block; sweep 512/1024/2048.
NUM_PARTS = 2           # pass-1 partial-reduction parts (2 TCs on v7x).


def _round_up(a, b):
    return (a + b - 1) // b * b


# ---------------------------------------------------------------------------
# Kernel 1: global min / max reduction (observer statistics)
#   outputs: per-part (8,128) running min / max accumulators (resident across t)
# ---------------------------------------------------------------------------
def _minmax_kernel(x_ref, min_ref, max_ref, *, n_rows, block_rows,
                   tiles_per_part, ragged):
    c = pl.program_id(0)
    t = pl.program_id(1)

    @pl.when(t == 0)
    def _():
        min_ref[...] = jnp.full(min_ref.shape, jnp.inf, dtype=jnp.float32)
        max_ref[...] = jnp.full(max_ref.shape, -jnp.inf, dtype=jnp.float32)

    x = x_ref[...].astype(jnp.float32)

    def update(x_min, x_max):
        # (block_rows,128) -> (block_rows//8, 8, 128); axis-0 reduce is pure VPU
        xm = x_min.reshape(-1, 8, LANE).min(axis=0)[None]
        xM = x_max.reshape(-1, 8, LANE).max(axis=0)[None]
        min_ref[...] = jnp.minimum(min_ref[...], xm)
        max_ref[...] = jnp.maximum(max_ref[...], xM)

    if not ragged:
        update(x, x)
    else:
        row0 = (c * tiles_per_part + t) * block_rows

        @pl.when(row0 + block_rows <= n_rows)          # fully in-bounds tile
        def _():
            update(x, x)

        @pl.when(row0 + block_rows > n_rows)           # (partially) OOB tile
        def _():
            rows = row0 + jax.lax.broadcasted_iota(jnp.int32, x.shape, 0)
            valid = rows < n_rows
            update(jnp.where(valid, x, jnp.inf), jnp.where(valid, x, -jnp.inf))


# ---------------------------------------------------------------------------
# Kernel 2: fake-quantize elementwise hot path (ALSQPlus.forward)
#   scale / zero_point are derived in-kernel from the pass-1 partials (scalar
#   ops once per grid step), so no intermediate XLA scalar ops between kernels.
# ---------------------------------------------------------------------------
def _quant_kernel(min_ref, max_ref, x_ref, o_ref, *, qn, qp):
    mn = jnp.min(min_ref[...])
    mx = jnp.max(max_ref[...])
    s = (mx - mn) / jnp.float32(qp - qn)
    b = mn - s * jnp.float32(qn)
    inv_s = 1.0 / s            # exact scalar reciprocal (NOT approx), hoisted
    x = x_ref[...].astype(jnp.float32)
    # torch.round == round-half-to-even == jnp.round
    q = jnp.clip(jnp.round((x - b) * inv_s), jnp.float32(qn), jnp.float32(qp))
    o_ref[...] = (q * s + b).astype(o_ref.dtype)


# ---------------------------------------------------------------------------
# Wrapper
# ---------------------------------------------------------------------------
@functools.partial(jax.jit, static_argnames=("bits", "qtype"))
def lsq_plus_act_quantizer_fwd(x, bits=8, qtype="quint"):
    assert bits != 1, "LSQ doesn't support binary quantization"
    assert qtype in ("qint", "quint")
    if qtype == "quint":
        qn, qp = 0, 2 ** bits - 1
    else:
        qn, qp = -(2 ** (bits - 1)), 2 ** (bits - 1) - 1

    orig_shape = x.shape
    numel = x.size

    # Lane-dense (rows, 128) view. For typical activation sizes this is a
    # metadata-only reshape (no HBM copy). Only if numel is not a multiple of
    # 128 do we edge-pad (edge values are neutral for min/max).
    flat = x.reshape(-1)
    lane_pad = (-numel) % LANE
    if lane_pad:
        flat = jnp.pad(flat, (0, lane_pad), mode="edge")
    n_rows = flat.shape[0] // LANE
    x2 = flat.reshape(n_rows, LANE)

    block_rows = min(MAX_BLOCK_ROWS, _round_up(n_rows, 8))
    n_tiles = pl.cdiv(n_rows, block_rows)
    tiles_per_part = pl.cdiv(n_tiles, NUM_PARTS)
    # ragged: last real tile partial, and/or extra (clamped) tiles in part 1.
    ragged = (n_tiles * block_rows != n_rows) or (tiles_per_part * NUM_PARTS != n_tiles)

    # --- pass 1: global min/max (observer), split into NUM_PARTS partials ---
    min_parts, max_parts = pl.pallas_call(
        functools.partial(_minmax_kernel, n_rows=n_rows, block_rows=block_rows,
                          tiles_per_part=tiles_per_part, ragged=ragged),
        out_shape=(
            jax.ShapeDtypeStruct((NUM_PARTS, 8, LANE), jnp.float32),
            jax.ShapeDtypeStruct((NUM_PARTS, 8, LANE), jnp.float32),
        ),
        grid=(NUM_PARTS, tiles_per_part),
        in_specs=[
            pl.BlockSpec(
                (block_rows, LANE),
                # clamp so the DMA never targets a fully-OOB block; the kernel
                # masks by the *intended* row index, so clamped tiles are no-ops
                lambda c, t: (jnp.minimum(c * tiles_per_part + t, n_tiles - 1), 0),
            )
        ],
        out_specs=(
            pl.BlockSpec((1, 8, LANE), lambda c, t: (c, 0, 0)),
            pl.BlockSpec((1, 8, LANE), lambda c, t: (c, 0, 0)),
        ),
        compiler_params=pltpu.CompilerParams(
            dimension_semantics=("parallel", "arbitrary")),
    )(x2)

    # grad_factor = 1/sqrt(numel * Qp) only affects backward; computed for parity.
    _ = 1.0 / math.sqrt(numel * qp)

    # --- pass 2: fake-quantize elementwise (writes original dtype directly) ---
    out2 = pl.pallas_call(
        functools.partial(_quant_kernel, qn=qn, qp=qp),
        out_shape=jax.ShapeDtypeStruct((n_rows, LANE), x.dtype),
        grid=(n_tiles,),
        in_specs=[
            pl.BlockSpec((NUM_PARTS, 8, LANE), lambda i: (0, 0, 0)),
            pl.BlockSpec((NUM_PARTS, 8, LANE), lambda i: (0, 0, 0)),
            pl.BlockSpec((block_rows, LANE), lambda i: (i, 0)),
        ],
        out_specs=pl.BlockSpec((block_rows, LANE), lambda i: (i, 0)),
        compiler_params=pltpu.CompilerParams(
            dimension_semantics=("parallel",)),
    )(min_parts, max_parts, x2)

    if lane_pad:
        out = out2.reshape(-1)[:numel].reshape(orig_shape)
    else:
        out = out2.reshape(orig_shape)

    # observer_init == 1 branch: new scale / zero_point for module state.
    # (These tiny scalar ops are off the quant kernel's critical path.)
    min_val = jnp.min(min_parts)
    max_val = jnp.max(max_parts)
    scale = ((max_val - min_val) / jnp.float32(qp - qn)).reshape(1)
    zero_point = (min_val - scale * jnp.float32(qn)).reshape(1)
    # TODO(synk): EMA observer branch (observer_init == 0) and learning-only path
    # reuse the same quant kernel with externally supplied scale/zero_point;
    # ALSQPlus.backward (STE gradients) is not implemented here.

    return out, scale, zero_point


# ---------------------------------------------------------------------------
# Pure-JAX reference (same math as the kernel: exact scalar 1/scale, then mul;
# identical to the torch divide formulation except possibly 1 ulp at exact
# quantization-bin boundaries).
# ---------------------------------------------------------------------------
def _reference(x, bits=8, qtype="quint"):
    if qtype == "quint":
        qn, qp = 0, 2 ** bits - 1
    else:
        qn, qp = -(2 ** (bits - 1)), 2 ** (bits - 1) - 1
    xf = x.astype(jnp.float32)
    mn = jnp.min(xf)
    mx = jnp.max(xf)
    scale = (mx - mn) / jnp.float32(qp - qn)
    zp = mn - scale * jnp.float32(qn)
    inv = 1.0 / scale
    q = jnp.clip(jnp.round((xf - zp) * inv), jnp.float32(qn), jnp.float32(qp))
    return (q * scale + zp).astype(x.dtype), scale, zp


if __name__ == "__main__":
    key = jax.random.PRNGKey(0)
    # NCHW input like the PyTorch module would see from a conv feature map.
    x = jax.random.normal(key, (2, 4, 16, 16), dtype=jnp.float32)

    out, scale, zero_point = lsq_plus_act_quantizer_fwd(x, bits=8, qtype="quint")
    out = jax.block_until_ready(out)

    ref_out, ref_scale, ref_zp = _reference(x, bits=8, qtype="quint")
    np.testing.assert_allclose(np.asarray(out), np.asarray(ref_out),
                               rtol=1e-5, atol=1e-5)
    np.testing.assert_allclose(np.asarray(scale), np.asarray(ref_scale).reshape(1),
                               rtol=1e-6, atol=1e-6)
    np.testing.assert_allclose(np.asarray(zero_point), np.asarray(ref_zp).reshape(1),
                               rtol=1e-6, atol=1e-6)

    print("KERNEL_OK")
</pallas_src>

<mosaic_0001>
module attributes {stable_mosaic.version = 11 : i64} {
  func.func @_minmax_kernel(%arg0: i32, %arg1: i32, %arg2: memref<16x128xf32, #tpu.memory_space<vmem>>, %arg3: memref<1x8x128xf32, #tpu.memory_space<vmem>>, %arg4: memref<1x8x128xf32, #tpu.memory_space<vmem>>) attributes {dimension_semantics = [#tpu.dimension_semantics<parallel>, #tpu.dimension_semantics<arbitrary>], iteration_bounds = array<i64: 2, 1>, scalar_prefetch = 0 : i64, scratch_operands = 0 : i64, tpu.core_type = #tpu.core_type<tc>, window_params = [{transform_indices = @transform_0, window_bounds = array<i64: 16, 128>}, {transform_indices = @transform_1, window_bounds = array<i64: 1, 8, 128>}, {transform_indices = @transform_2, window_bounds = array<i64: 1, 8, 128>}]} {
    %c0_i32 = arith.constant 0 : i32
    %0 = arith.cmpi eq, %arg1, %c0_i32 : i32
    %1 = arith.extui %0 : i1 to i32
    %c0_i32_0 = arith.constant 0 : i32
    %2 = arith.cmpi ne, %1, %c0_i32_0 : i32
    scf.if %2 {
      %cst = arith.constant 0x7F800000 : f32
      %15 = vector.broadcast %cst : f32 to vector<1x8x128xf32>
      %c0_8 = arith.constant 0 : index
      %c0_9 = arith.constant 0 : index
      %c0_10 = arith.constant 0 : index
      %16 = vector.load %arg3[%c0_8, %c0_9, %c0_10] : memref<1x8x128xf32, #tpu.memory_space<vmem>>, vector<1x8x128xf32>
      tpu.vector_store %arg3[%c0_8, %c0_9, %c0_10], %15 {strides = array<i32>} : memref<1x8x128xf32, #tpu.memory_space<vmem>>, vector<1x8x128xf32>,
      %cst_11 = arith.constant 0xFF800000 : f32
      %17 = vector.broadcast %cst_11 : f32 to vector<1x8x128xf32>
      %c0_12 = arith.constant 0 : index
      %c0_13 = arith.constant 0 : index
      %c0_14 = arith.constant 0 : index
      %18 = vector.load %arg4[%c0_12, %c0_13, %c0_14] : memref<1x8x128xf32, #tpu.memory_space<vmem>>, vector<1x8x128xf32>
      tpu.vector_store %arg4[%c0_12, %c0_13, %c0_14], %17 {strides = array<i32>} : memref<1x8x128xf32, #tpu.memory_space<vmem>>, vector<1x8x128xf32>,
    } else {
    }
    %c0 = arith.constant 0 : index
    %c0_1 = arith.constant 0 : index
    %3 = vector.load %arg2[%c0, %c0_1] : memref<16x128xf32, #tpu.memory_space<vmem>>, vector<16x128xf32>
    %c1_i32 = arith.constant 1 : i32
    %4 = arith.muli %arg0, %c1_i32 : i32
    %5 = arith.addi %4, %arg1 : i32
    %c16_i32 = arith.constant 16 : i32
    %6 = arith.muli %5, %c16_i32 : i32
    %c16_i32_2 = arith.constant 16 : i32
    %7 = arith.addi %6, %c16_i32_2 : i32
    %c16_i32_3 = arith.constant 16 : i32
    %8 = arith.cmpi sle, %7, %c16_i32_3 : i32
    %9 = arith.extui %8 : i1 to i32
    %c0_i32_4 = arith.constant 0 : i32
    %10 = arith.cmpi ne, %9, %c0_i32_4 : i32
    scf.if %10 {
      %15 = vector.shape_cast %3 : vector<16x128xf32> to vector<2x8x128xf32>
      %cst = arith.constant dense<0x7F800000> : vector<8x128xf32>
      %16 = vector.multi_reduction <minimumf>, %15, %cst [0] : vector<2x8x128xf32> to vector<8x128xf32>
      %17 = vector.shape_cast %16 : vector<8x128xf32> to vector<1x8x128xf32>
      %18 = vector.shape_cast %3 : vector<16x128xf32> to vector<2x8x128xf32>
      %cst_8 = arith.constant dense<0xFF800000> : vector<8x128xf32>
      %19 = vector.multi_reduction <maximumf>, %18, %cst_8 [0] : vector<2x8x128xf32> to vector<8x128xf32>
      %20 = vector.shape_cast %19 : vector<8x128xf32> to vector<1x8x128xf32>
      %c0_9 = arith.constant 0 : index
      %c0_10 = arith.constant 0 : index
      %c0_11 = arith.constant 0 : index
      %21 = vector.load %arg3[%c0_9, %c0_10, %c0_11] : memref<1x8x128xf32, #tpu.memory_space<vmem>>, vector<1x8x128xf32>
      %22 = arith.minimumf %21, %17 : vector<1x8x128xf32>
      %c0_12 = arith.constant 0 : index
      %c0_13 = arith.constant 0 : index
      %c0_14 = arith.constant 0 : index
      %23 = vector.load %arg3[%c0_12, %c0_13, %c0_14] : memref<1x8x128xf32, #tpu.memory_space<vmem>>, vector<1x8x128xf32>
      tpu.vector_store %arg3[%c0_12, %c0_13, %c0_14], %22 {strides = array<i32>} : memref<1x8x128xf32, #tpu.memory_space<vmem>>, vector<1x8x128xf32>,
      %c0_15 = arith.constant 0 : index
      %c0_16 = arith.constant 0 : index
      %c0_17 = arith.constant 0 : index
      %24 = vector.load %arg4[%c0_15, %c0_16, %c0_17] : memref<1x8x128xf32, #tpu.memory_space<vmem>>, vector<1x8x128xf32>
      %25 = arith.maximumf %24, %20 : vector<1x8x128xf32>
      %c0_18 = arith.constant 0 : index
      %c0_19 = arith.constant 0 : index
      %c0_20 = arith.constant 0 : index
      %26 = vector.load %arg4[%c0_18, %c0_19, %c0_20] : memref<1x8x128xf32, #tpu.memory_space<vmem>>, vector<1x8x128xf32>
      tpu.vector_store %arg4[%c0_18, %c0_19, %c0_20], %25 {strides = array<i32>} : memref<1x8x128xf32, #tpu.memory_space<vmem>>, vector<1x8x128xf32>,
    } else {
    }
    %c16_i32_5 = arith.constant 16 : i32
    %11 = arith.addi %6, %c16_i32_5 : i32
    %c16_i32_6 = arith.constant 16 : i32
    %12 = arith.cmpi sgt, %11, %c16_i32_6 : i32
    %13 = arith.extui %12 : i1 to i32
    %c0_i32_7 = arith.constant 0 : i32
    %14 = arith.cmpi ne, %13, %c0_i32_7 : i32
    scf.if %14 {
      %15 = tpu.iota {dimensions = array<i32: 0>} : vector<16x128xi32>
      %16 = vector.broadcast %6 : i32 to vector<16x128xi32>
      %17 = arith.addi %16, %15 : vector<16x128xi32>
      %c16_i32_8 = arith.constant 16 : i32
      %18 = vector.broadcast %c16_i32_8 : i32 to vector<16x128xi32>
      %19 = arith.cmpi slt, %17, %18 : vector<16x128xi32>
      %cst = arith.constant 0x7F800000 : f32
      %20 = vector.broadcast %cst : f32 to vector<16x128xf32>
      %21 = arith.select %19, %3, %20 : vector<16x128xi1>, vector<16x128xf32>
      %cst_9 = arith.constant 0xFF800000 : f32
      %22 = vector.broadcast %cst_9 : f32 to vector<16x128xf32>
      %23 = arith.select %19, %3, %22 : vector<16x128xi1>, vector<16x128xf32>
      %24 = vector.shape_cast %21 : vector<16x128xf32> to vector<2x8x128xf32>
      %cst_10 = arith.constant dense<0x7F800000> : vector<8x128xf32>
      %25 = vector.multi_reduction <minimumf>, %24, %cst_10 [0] : vector<2x8x128xf32> to vector<8x128xf32>
      %26 = vector.shape_cast %25 : vector<8x128xf32> to vector<1x8x128xf32>
      %27 = vector.shape_cast %23 : vector<16x128xf32> to vector<2x8x128xf32>
      %cst_11 = arith.constant dense<0xFF800000> : vector<8x128xf32>
      %28 = vector.multi_reduction <maximumf>, %27, %cst_11 [0] : vector<2x8x128xf32> to vector<8x128xf32>
      %29 = vector.shape_cast %28 : vector<8x128xf32> to vector<1x8x128xf32>
      %c0_12 = arith.constant 0 : index
      %c0_13 = arith.constant 0 : index
      %c0_14 = arith.constant 0 : index
      %30 = vector.load %arg3[%c0_12, %c0_13, %c0_14] : memref<1x8x128xf32, #tpu.memory_space<vmem>>, vector<1x8x128xf32>
      %31 = arith.minimumf %30, %26 : vector<1x8x128xf32>
      %c0_15 = arith.constant 0 : index
      %c0_16 = arith.constant 0 : index
      %c0_17 = arith.constant 0 : index
      %32 = vector.load %arg3[%c0_15, %c0_16, %c0_17] : memref<1x8x128xf32, #tpu.memory_space<vmem>>, vector<1x8x128xf32>
      tpu.vector_store %arg3[%c0_15, %c0_16, %c0_17], %31 {strides = array<i32>} : memref<1x8x128xf32, #tpu.memory_space<vmem>>, vector<1x8x128xf32>,
      %c0_18 = arith.constant 0 : index
      %c0_19 = arith.constant 0 : index
      %c0_20 = arith.constant 0 : index
      %33 = vector.load %arg4[%c0_18, %c0_19, %c0_20] : memref<1x8x128xf32, #tpu.memory_space<vmem>>, vector<1x8x128xf32>
      %34 = arith.maximumf %33, %29 : vector<1x8x128xf32>
      %c0_21 = arith.constant 0 : index
      %c0_22 = arith.constant 0 : index
      %c0_23 = arith.constant 0 : index
      %35 = vector.load %arg4[%c0_21, %c0_22, %c0_23] : memref<1x8x128xf32, #tpu.memory_space<vmem>>, vector<1x8x128xf32>
      tpu.vector_store %arg4[%c0_21, %c0_22, %c0_23], %34 {strides = array<i32>} : memref<1x8x128xf32, #tpu.memory_space<vmem>>, vector<1x8x128xf32>,
    } else {
    }
    return
  }
  func.func @transform_0(%arg0: i32, %arg1: i32) -> (i32, i32) {
    %c1_i32 = arith.constant 1 : i32
    %0 = arith.muli %arg0, %c1_i32 : i32
    %1 = arith.addi %0, %arg1 : i32
    %c0_i32 = arith.constant 0 : i32
    %2 = arith.minsi %1, %c0_i32 : i32
    %c0_i32_0 = arith.constant 0 : i32
    %c0_i32_1 = arith.constant 0 : i32
    return %2, %c0_i32_0 : i32, i32
  }
  func.func @transform_1(%arg0: i32, %arg1: i32) -> (i32, i32, i32) {
    %c0_i32 = arith.constant 0 : i32
    %c0_i32_0 = arith.constant 0 : i32
    %c0_i32_1 = arith.constant 0 : i32
    return %arg0, %c0_i32, %c0_i32_0 : i32, i32, i32
  }
  func.func @transform_2(%arg0: i32, %arg1: i32) -> (i32, i32, i32) {
    %c0_i32 = arith.constant 0 : i32
    %c0_i32_0 = arith.constant 0 : i32
    %c0_i32_1 = arith.constant 0 : i32
    return %arg0, %c0_i32, %c0_i32_0 : i32, i32, i32
  }
}

module attributes {stable_mosaic.version = 11 : i64} {
  func.func @_quant_kernel(%arg0: i32, %arg1: memref<2x8x128xf32, #tpu.memory_space<vmem>>, %arg2: memref<2x8x128xf32, #tpu.memory_space<vmem>>, %arg3: memref<16x128xf32, #tpu.memory_space<vmem>>, %arg4: memref<16x128xf32, #tpu.memory_space<vmem>>) attributes {dimension_semantics = [#tpu.dimension_semantics<parallel>], iteration_bounds = array<i64: 1>, scalar_prefetch = 0 : i64, scratch_operands = 0 : i64, tpu.core_type = #tpu.core_type<tc>, window_params = [{pipeline_mode = #tpu.pipeline_mode<synchronous>, transform_indices = @transform_0, window_bounds = array<i64: 2, 8, 128>}, {pipeline_mode = #tpu.pipeline_mode<synchronous>, transform_indices = @transform_1, window_bounds = array<i64: 2, 8, 128>}, {transform_indices = @transform_2, window_bounds = array<i64: 16, 128>}, {transform_indices = @transform_3, window_bounds = array<i64: 16, 128>}]} {
    %c0 = arith.constant 0 : index
    %c0_0 = arith.constant 0 : index
    %c0_1 = arith.constant 0 : index
    %0 = vector.load %arg1[%c0, %c0_0, %c0_1] : memref<2x8x128xf32, #tpu.memory_space<vmem>>, vector<2x8x128xf32>
    %1 = vector.shape_cast %0 : vector<2x8x128xf32> to vector<1x2x8x128xf32>
    %cst = arith.constant dense<0x7F800000> : vector<1xf32>
    %2 = vector.multi_reduction <minimumf>, %1, %cst [1, 2, 3] : vector<1x2x8x128xf32> to vector<1xf32>
    %3 = vector.shape_cast %2 : vector<1xf32> to vector<1x1x1x1xf32>
    %4 = vector.extract %3[0, 0, 0, 0] : f32 from vector<1x1x1x1xf32>
    %c0_2 = arith.constant 0 : index
    %c0_3 = arith.constant 0 : index
    %c0_4 = arith.constant 0 : index
    %5 = vector.load %arg2[%c0_2, %c0_3, %c0_4] : memref<2x8x128xf32, #tpu.memory_space<vmem>>, vector<2x8x128xf32>
    %6 = vector.shape_cast %5 : vector<2x8x128xf32> to vector<1x2x8x128xf32>
    %cst_5 = arith.constant dense<0xFF800000> : vector<1xf32>
    %7 = vector.multi_reduction <maximumf>, %6, %cst_5 [1, 2, 3] : vector<1x2x8x128xf32> to vector<1xf32>
    %8 = vector.shape_cast %7 : vector<1xf32> to vector<1x1x1x1xf32>
    %9 = vector.extract %8[0, 0, 0, 0] : f32 from vector<1x1x1x1xf32>
    %10 = arith.subf %9, %4 : f32
    %cst_6 = arith.constant 2.550000e+02 : f32
    %11 = arith.divf %10, %cst_6 : f32
    %cst_7 = arith.constant 0.000000e+00 : f32
    %12 = arith.mulf %11, %cst_7 : f32
    %13 = arith.subf %4, %12 : f32
    %cst_8 = arith.constant 1.000000e+00 : f32
    %14 = arith.divf %cst_8, %11 : f32
    %c0_9 = arith.constant 0 : index
    %c0_10 = arith.constant 0 : index
    %15 = vector.load %arg3[%c0_9, %c0_10] : memref<16x128xf32, #tpu.memory_space<vmem>>, vector<16x128xf32>
    %16 = vector.broadcast %13 : f32 to vector<16x128xf32>
    %17 = arith.subf %15, %16 : vector<16x128xf32>
    %18 = vector.broadcast %14 : f32 to vector<16x128xf32>
    %19 = arith.mulf %17, %18 : vector<16x128xf32>
    %20 = math.roundeven %19 : vector<16x128xf32>
    %cst_11 = arith.constant 0.000000e+00 : f32
    %cst_12 = arith.constant 2.550000e+02 : f32
    %21 = vector.broadcast %cst_11 : f32 to vector<16x128xf32>
    %22 = arith.maximumf %21, %20 : vector<16x128xf32>
    %23 = vector.broadcast %cst_12 : f32 to vector<16x128xf32>
    %24 = arith.minimumf %23, %22 : vector<16x128xf32>
    %25 = vector.broadcast %11 : f32 to vector<16x128xf32>
    %26 = arith.mulf %24, %25 : vector<16x128xf32>
    %27 = vector.broadcast %13 : f32 to vector<16x128xf32>
    %28 = arith.addf %26, %27 : vector<16x128xf32>
    %c0_13 = arith.constant 0 : index
    %c0_14 = arith.constant 0 : index
    %29 = vector.load %arg4[%c0_13, %c0_14] : memref<16x128xf32, #tpu.memory_space<vmem>>, vector<16x128xf32>
    tpu.vector_store %arg4[%c0_13, %c0_14], %28 {strides = array<i32>} : memref<16x128xf32, #tpu.memory_space<vmem>>, vector<16x128xf32>,
    return
  }
  func.func @transform_0(%arg0: i32) -> (i32, i32, i32) {
    %c0_i32 = arith.constant 0 : i32
    %c0_i32_0 = arith.constant 0 : i32
    %c0_i32_1 = arith.constant 0 : i32
    %c0_i32_2 = arith.constant 0 : i32
    return %c0_i32, %c0_i32_0, %c0_i32_1 : i32, i32, i32
  }
  func.func @transform_1(%arg0: i32) -> (i32, i32, i32) {
    %c0_i32 = arith.constant 0 : i32
    %c0_i32_0 = arith.constant 0 : i32
    %c0_i32_1 = arith.constant 0 : i32
    %c0_i32_2 = arith.constant 0 : i32
    return %c0_i32, %c0_i32_0, %c0_i32_1 : i32, i32, i32
  }
  func.func @transform_2(%arg0: i32) -> (i32, i32) {
    %c0_i32 = arith.constant 0 : i32
    %c0_i32_0 = arith.constant 0 : i32
    return %arg0, %c0_i32 : i32, i32
  }
  func.func @transform_3(%arg0: i32) -> (i32, i32) {
    %c0_i32 = arith.constant 0 : i32
    %c0_i32_0 = arith.constant 0 : i32
    return %arg0, %c0_i32 : i32, i32
  }
}

</mosaic_0001>

<llo_original>
// kernel: lsq_plus_act_quantizer_fwd.2
$region0: #{lsq_plus_act_quantizer_fwd.2}
  #allocation0 [shape = 'u32[]', space=smem, size = 0x4, offset = 0x4, fixed_abs, tag = 'smem constant byte address 0x4 - core index']
  #allocation1 [shape = 'u32[144,128]{1,0:T(1,128)}', space=vmem, size = 0x12000, scoped, tag = 'internal scratch']
  %s0 = inlined_call_operand.vmem [shape: f32[16,128], index: 0, kind: input, shape index: {}]
  %s1 = inlined_call_operand.vmem [shape: f32[2,8,128], index: 1, kind: output, shape index: {0}]
  %s2 = inlined_call_operand.vmem [shape: f32[2,8,128], index: 2, kind: output, shape index: {1}]
  %3 = xla_tuple %s1, %s2
  %s4 = sld [smem:[#allocation0]]
  $region57: #{lsq_plus_act_quantizer_fwd.2} parent=0
    _
  %s6 = ssub.s32 1, %s4
  %s7 = scalar_select 0, %s6, %s4
  loop: start=0, step=1, limit=4
  $region2: #{lsq_plus_act_quantizer_fwd.2} parent=0 // loop_pre_header
    _
  $region3: #{lsq_plus_act_quantizer_fwd.2} parent=0 // loop_header
    %s9 = sphi 0, %s13
    %p10 = scmp.ge.s32.totalorder %s9, 4
    %s16 = sphi 0, %s28
    %s17 = sphi 0, %s24
    %s18 = sphi 0, %s16
    %s19 = sphi 0, %s17
    %s20 = sphi 0, %s18
    %s21 = sphi 0, %s19
    %s37 = sphi 0, %s39
    %s40 = sphi 0, %s37
    %s41 = sphi 0, %s40
    %s57 = sphi 0, %s41
    %s63 = sphi 0, %s65
    %s66 = sphi 0, %s63
    %s67 = sphi 0, %s66
    %s83 = sphi 0, %s67
    %s89 = sphi 0, %s91
    %s92 = sphi 0, %s89
    %s93 = sphi 0, %s92
    %s109 = sphi 0, %s93
  $region4: #{lsq_plus_act_quantizer_fwd.2} parent=0 // loop_header_branch
    %12 = sbr.rel (%p10) target = $region8
  $region5: #{lsq_plus_act_quantizer_fwd.2} parent=0 // loop_body
    %s14 = ssub.s32 %s9, 1
    %s15 = ssub.s32 %s9, 2
    %s22 = sadd.s32 1, %s17
    %p23 = scmp.ge.s32.totalorder %s22, 1
    %s24 = scalar_select %p23, 0, %s22
    %s25 = sadd.s32 1, %s16
    %s26 = scalar_select %p23, %s25, %s16
    %p27 = scmp.ge.s32.totalorder %s26, 2
    %s28 = scalar_select %p27, 0, %s26
    %s29 = sadd.s32 %s16, %s17
    %p30 = scmp.lt.s32.totalorder %s29, 0
    %s31 = scalar_select %p30, %s29, 0
    %s32 = sadd.s32 %s28, %s24
    %p33 = scmp.lt.s32.totalorder %s32, 0
    %s34 = scalar_select %p33, %s32, 0
    %s35 = ssub.s32 %s31, %s34
    %p36 = scmp.eq.s32.totalorder %s35, 0
    %s38 = sadd.s32 %s37, 1
    %s39 = scalar_select %p36, %s37, %s38
    %p42 = pneg %p36
    %p43 = scmp.eq.s32.totalorder %s9, 1
    %p44 = por %p42, %p43
    %p45 = scmp.ne.s32.totalorder %s37, %s40
    %p46 = scmp.eq.s32.totalorder %s9, 0
    %p47 = por %p45, %p46
    %p48 = scmp.ne.s32.totalorder %s37, %s40
    %p49 = scmp.eq.s32.totalorder %s14, 1
    %p50 = por %p48, %p49
    %p51 = scmp.ne.s32.totalorder %s40, %s41
    %p52 = scmp.eq.s32.totalorder %s14, 0
    %p53 = por %p51, %p52
    %p54 = scmp.ne.s32.totalorder %s40, %s41
    %p55 = scmp.eq.s32.totalorder %s15, 1
    %p56 = por %p54, %p55
    %p58 = scmp.ne.s32.totalorder %s41, %s57
    %p59 = scmp.eq.s32.totalorder %s15, 0
    %p60 = por %p58, %p59
    %s61 = ssub.s32 %s16, %s28
    %p62 = scmp.eq.s32.totalorder %s61, 0
    %s64 = sadd.s32 %s63, 1
    %s65 = scalar_select %p62, %s63, %s64
    %p68 = pneg %p62
    %p69 = scmp.eq.s32.totalorder %s9, 1
    %p70 = por %p68, %p69
    %p71 = scmp.ne.s32.totalorder %s63, %s66
    %p72 = scmp.eq.s32.totalorder %s9, 0
    %p73 = por %p71, %p72
    %p74 = scmp.ne.s32.totalorder %s63, %s66
    %p75 = scmp.eq.s32.totalorder %s14, 1
    %p76 = por %p74, %p75
    %p77 = scmp.ne.s32.totalorder %s66, %s67
    %p78 = scmp.eq.s32.totalorder %s14, 0
    %p79 = por %p77, %p78
    %p80 = scmp.ne.s32.totalorder %s66, %s67
    %p81 = scmp.eq.s32.totalorder %s15, 1
    %p82 = por %p80, %p81
    %p84 = scmp.ne.s32.totalorder %s67, %s83
    %p85 = scmp.eq.s32.totalorder %s15, 0
    %p86 = por %p84, %p85
    %s87 = ssub.s32 %s16, %s28
    %p88 = scmp.eq.s32.totalorder %s87, 0
    %s90 = sadd.s32 %s89, 1
    %s91 = scalar_select %p88, %s89, %s90
    %p94 = pneg %p88
    %p95 = scmp.eq.s32.totalorder %s9, 1
    %p96 = por %p94, %p95
    %p97 = scmp.ne.s32.totalorder %s89, %s92
    %p98 = scmp.eq.s32.totalorder %s9, 0
    %p99 = por %p97, %p98
    %p100 = scmp.ne.s32.totalorder %s89, %s92
    %p101 = scmp.eq.s32.totalorder %s14, 1
    %p102 = por %p100, %p101
    %p103 = scmp.ne.s32.totalorder %s92, %s93
    %p104 = scmp.eq.s32.totalorder %s14, 0
    %p105 = por %p103, %p104
    %p106 = scmp.ne.s32.totalorder %s92, %s93
    %p107 = scmp.eq.s32.totalorder %s15, 1
    %p108 = por %p106, %p107
    %p110 = scmp.ne.s32.totalorder %s93, %s109
    %p111 = scmp.eq.s32.totalorder %s15, 0
    %p112 = por %p110, %p111
    %p113 = scmp.le.s32.totalorder 1, %s9
    %p114 = scmp.lt.s32.totalorder %s9, 3
    %p115 = pnand %p113, %p114
    %p116 = pneg %p115
    // Predicated region
    $region9: #{lsq_plus_act_quantizer_fwd.2} parent=5 // pred_check
      _
    $region10: #{lsq_plus_act_quantizer_fwd.2} parent=5 // pred_check_branch
      %118 = sbr.rel (%p115) target = $region12
    $region11: #{lsq_plus_act_quantizer_fwd.2} parent=5 // pred_region
      %s119 = ssub.s32 %s9, 1
    $region12: #{lsq_plus_act_quantizer_fwd.2} parent=5 // pred_fallthru
      _
    %p120 = scmp.lt.s32.totalorder %s9, 2
    // Predicated region
    $region13: #{lsq_plus_act_quantizer_fwd.2} parent=5 // pred_check
      %p121 = pneg %p120
    $region14: #{lsq_plus_act_quantizer_fwd.2} parent=5 // pred_check_branch
      %123 = sbr.rel (%p121) target = $region16
    $region15: #{lsq_plus_act_quantizer_fwd.2} parent=5 // pred_region
      // Predicated region
      $region17: #{lsq_plus_act_quantizer_fwd.2} parent=15 // pred_check
        %p124 = pneg %p47
      $region18: #{lsq_plus_act_quantizer_fwd.2} parent=15 // pred_check_branch
        %126 = sbr.rel (%p124) target = $region20
      $region19: #{lsq_plus_act_quantizer_fwd.2} parent=15 // pred_region
        %s127 = sadd.s32 %s16, %s17
        %p128 = scmp.lt.s32.totalorder %s127, 0
        %s129 = scalar_select %p128, %s127, 0
        %s130 = smul.u32 2, %s129
        %p131 = scmp.lt.s32.totalorder %s130, 1
        %s132 = scalar_select %p131, %s130, 1
        %s133 = smul.addr %s132, 8
        %s134 = scalar_lea.vmem %s0, %s133
        %s135 = sadd.s32 %s16, %s17
        %p136 = scmp.lt.s32.totalorder %s135, 0
        %s137 = scalar_select %p136, %s135, 0
        %s138 = smul.u32 2, %s137
      $region20: #{lsq_plus_act_quantizer_fwd.2} parent=15 // pred_fallthru
        _
    $region16: #{lsq_plus_act_quantizer_fwd.2} parent=5 // pred_fallthru
      _
    %p139 = scmp.le.s32.totalorder 1, %s9
    %p140 = scmp.lt.s32.totalorder %s9, 3
    %p141 = pnand %p139, %p140
    %p142 = pneg %p141
    // Predicated region
    $region21: #{lsq_plus_act_quantizer_fwd.2} parent=5 // pred_check
      _
    $region22: #{lsq_plus_act_quantizer_fwd.2} parent=5 // pred_check_branch
      %144 = sbr.rel (%p141) target = $region24
    $region23: #{lsq_plus_act_quantizer_fwd.2} parent=5 // pred_region
      %s145 = ssub.s32 %s9, 1
      %s146 = sadd.s32 %s18, %s19
      %p147 = scmp.lt.s32.totalorder %s146, 0
      %s148 = scalar_select %p147, %s146, 0
      %s149 = smul.u32 2, %s148
      %p150 = scmp.lt.s32.totalorder %s149, 1
      %s151 = scalar_select %p150, %s149, 1
      %s152 = smul.addr %s151, 8
      %s153 = scalar_lea.vmem %s0, %s152
      %p154 = pneg %p53
      %p155 = pneg %p50
      %p156 = pneg %p79
      %p157 = pneg %p76
      %p158 = scmp.lt.s32.totalorder %s18, 1
      %s159 = scalar_select %p158, %s18, 1
      %s160 = smul.addr %s159, 8
      %s161 = scalar_lea.vmem %s1, %s160
      %p162 = pneg %p105
      %p163 = pneg %p102
      %p164 = scmp.lt.s32.totalorder %s18, 1
      %s165 = scalar_select %p164, %s18, 1
      %s166 = smul.addr %s165, 8
      %s167 = scalar_lea.vmem %s2, %s166
      %s168 = sadd.s32 %s18, %s19
      %p169 = scmp.lt.s32.totalorder %s168, 0
      %s170 = scalar_select %p169, %s168, 0
      %s171 = smul.u32 2, %s170
      %p172 = scmp.lt.s32.totalorder %s171, 1
      %s173 = scalar_select %p172, %s171, 1
      %s174 = smul.addr %s173, 8
      %s175 = scalar_lea.vmem %s0, %s174
      %s176 = sadd.s32 %s18, %s19
      %p177 = scmp.lt.s32.totalorder %s176, 0
      %s178 = scalar_select %p177, %s176, 0
      %s179 = smul.u32 2, %s178
      %p180 = scmp.lt.s32.totalorder %s18, 1
      %s181 = scalar_select %p180, %s18, 1
      %s182 = smul.addr %s181, 8
      %s183 = scalar_lea.vmem %s1, %s182
      %p184 = scmp.lt.s32.totalorder %s18, 1
      %s185 = scalar_select %p184, %s18, 1
      %s186 = smul.addr %s185, 8
      %s187 = scalar_lea.vmem %s2, %s186
      %p188 = scmp.eq.s32.totalorder %s19, 0
      // Predicated region
      $region25: #{lsq_plus_act_quantizer_fwd.2} parent=23 // pred_check
        %p189 = pneg %p188
      $region26: #{lsq_plus_act_quantizer_fwd.2} parent=23 // pred_check_branch
        %191 = sbr.rel (%p189) target = $region28
      $region27: #{lsq_plus_act_quantizer_fwd.2} parent=23 // pred_region
        %192 = vst [vmem:[%s183] sm:$0xff] inf
        %193 = vst [vmem:[%s187] sm:$0xff] -inf
      $region28: #{lsq_plus_act_quantizer_fwd.2} parent=23 // pred_fallthru
        _
      %v194 = vld [vmem:[%s175] sm:$0xff]
      %v195 = vld [vmem:[%s175 + $0x8] sm:$0xff]
      %s196 = sadd.s32 %s18, %s19
      %s197 = smul.u32 %s196, 16
      %s198 = sadd.s32 %s197, 16
      %p199 = scmp.le.s32.totalorder %s198, 16
      // Predicated region
      $region29: #{lsq_plus_act_quantizer_fwd.2} parent=23 // pred_check
        %p200 = pneg %p199
      $region30: #{lsq_plus_act_quantizer_fwd.2} parent=23 // pred_check_branch
        %202 = sbr.rel (%p200) target = $region32
      $region31: #{lsq_plus_act_quantizer_fwd.2} parent=23 // pred_region
        %v203 = vmin.f32 %v194, %v195
        %v204 = vmax.f32 %v194, %v195
        %v205 = vld [vmem:[%s183] sm:$0xff]
        %v206 = vmin.f32 %v205, %v203
        %207 = vst [vmem:[%s183] sm:$0xff] %v206
        %v208 = vld [vmem:[%s187] sm:$0xff]
        %v209 = vmax.f32 %v208, %v204
        %210 = vst [vmem:[%s187] sm:$0xff] %v209
      $region32: #{lsq_plus_act_quantizer_fwd.2} parent=23 // pred_fallthru
        _
      %p211 = scmp.gt.s32.totalorder %s198, 16
      // Predicated region
      $region33: #{lsq_plus_act_quantizer_fwd.2} parent=23 // pred_check
        %p212 = pneg %p211
      $region34: #{lsq_plus_act_quantizer_fwd.2} parent=23 // pred_check_branch
        %214 = sbr.rel (%p212) target = $region36
      $region35: #{lsq_plus_act_quantizer_fwd.2} parent=23 // pred_region
        %v215 = vlaneseq
        %v216 = vshrl.u32 %v215, 7
        %v217 = vadd.s32 %v216, 8
        %v218 = vstv %s197
        %v219 = vadd.s32 %v218, %v216
        %v220 = vadd.s32 %v218, %v217
        %vm221 = vcmp.lt.s32.totalorder %v219, 16
        %vm222 = vcmp.lt.s32.totalorder %v220, 16
        %v223 = vsel %vm221, %v194, inf
        %v224 = vsel %vm222, %v195, inf
        %v225 = vsel %vm221, %v194, -inf
        %v226 = vsel %vm222, %v195, -inf
        %v227 = vmin.f32 %v223, %v224
        %v228 = vmax.f32 %v225, %v226
        %v229 = vld [vmem:[%s183] sm:$0xff]
        %v230 = vmin.f32 %v229, %v227
        %231 = vst [vmem:[%s183] sm:$0xff] %v230
        %v232 = vld [vmem:[%s187] sm:$0xff]
        %v233 = vmax.f32 %v232, %v228
        %234 = vst [vmem:[%s187] sm:$0xff] %v233
      $region36: #{lsq_plus_act_quantizer_fwd.2} parent=23 // pred_fallthru
        _
      %p235 = scmp.lt.s32.totalorder %s18, 1
      %s236 = scalar_select %p235, %s18, 1
      %s237 = smul.addr %s236, 8
      %s238 = scalar_lea.vmem %s1, %s237
      %p239 = scmp.lt.s32.totalorder %s18, 1
      %s240 = scalar_select %p239, %s18, 1
      %s241 = smul.addr %s240, 8
      %s242 = scalar_lea.vmem %s2, %s241
      // Predicated region
      $region37: #{lsq_plus_act_quantizer_fwd.2} parent=23 // pred_check
        %p243 = pneg %p76
      $region38: #{lsq_plus_act_quantizer_fwd.2} parent=23 // pred_check_branch
        %245 = sbr.rel (%p243) target = $region40
      $region39: #{lsq_plus_act_quantizer_fwd.2} parent=23 // pred_region
        _
      $region40: #{lsq_plus_act_quantizer_fwd.2} parent=23 // pred_fallthru
        _
      // Predicated region
      $region41: #{lsq_plus_act_quantizer_fwd.2} parent=23 // pred_check
        %p246 = pneg %p102
      $region42: #{lsq_plus_act_quantizer_fwd.2} parent=23 // pred_check_branch
        %248 = sbr.rel (%p246) target = $region44
      $region43: #{lsq_plus_act_quantizer_fwd.2} parent=23 // pred_region
        _
      $region44: #{lsq_plus_act_quantizer_fwd.2} parent=23 // pred_fallthru
        _
    $region24: #{lsq_plus_act_quantizer_fwd.2} parent=5 // pred_fallthru
      _
    %p249 = scmp.le.s32.totalorder 2, %s9
    // Predicated region
    $region45: #{lsq_plus_act_quantizer_fwd.2} parent=5 // pred_check
      %p250 = pneg %p249
    $region46: #{lsq_plus_act_quantizer_fwd.2} parent=5 // pred_check_branch
      %252 = sbr.rel (%p250) target = $region48
    $region47: #{lsq_plus_act_quantizer_fwd.2} parent=5 // pred_region
      %s253 = ssub.s32 %s9, 2
      // Predicated region
      $region49: #{lsq_plus_act_quantizer_fwd.2} parent=47 // pred_check
        %p254 = pneg %p82
      $region50: #{lsq_plus_act_quantizer_fwd.2} parent=47 // pred_check_branch
        %256 = sbr.rel (%p254) target = $region52
      $region51: #{lsq_plus_act_quantizer_fwd.2} parent=47 // pred_region
        %p257 = scmp.lt.s32.totalorder %s20, 1
        %s258 = scalar_select %p257, %s20, 1
        %s259 = smul.addr %s258, 8
        %s260 = scalar_lea.vmem %s1, %s259
      $region52: #{lsq_plus_act_quantizer_fwd.2} parent=47 // pred_fallthru
        _
      // Predicated region
      $region53: #{lsq_plus_act_quantizer_fwd.2} parent=47 // pred_check
        %p261 = pneg %p108
      $region54: #{lsq_plus_act_quantizer_fwd.2} parent=47 // pred_check_branch
        %263 = sbr.rel (%p261) target = $region56
      $region55: #{lsq_plus_act_quantizer_fwd.2} parent=47 // pred_region
        %p264 = scmp.lt.s32.totalorder %s20, 1
        %s265 = scalar_select %p264, %s20, 1
        %s266 = smul.addr %s265, 8
        %s267 = scalar_lea.vmem %s2, %s266
      $region56: #{lsq_plus_act_quantizer_fwd.2} parent=47 // pred_fallthru
        _
    $region48: #{lsq_plus_act_quantizer_fwd.2} parent=5 // pred_fallthru
      _
  $region6: #{lsq_plus_act_quantizer_fwd.2} parent=0 // loop_footer
    %s13 = sadd.s32 1, %s9
  $region7: #{lsq_plus_act_quantizer_fwd.2} parent=0 // loop_footer_branch
    %8 = sbr.rel target = $region3
  $region8: #{lsq_plus_act_quantizer_fwd.2} parent=0 // loop_exit
    _

// kernel: lsq_plus_act_quantizer_fwd.3
$region0: #{lsq_plus_act_quantizer_fwd.3}
  #allocation0 [shape = 'u32[]', space=smem, size = 0x4, offset = 0x4, fixed_abs, tag = 'smem constant byte address 0x4 - core index']
  #allocation1 [shape = 'u32[144,128]{1,0:T(1,128)}', space=vmem, size = 0x12000, scoped, tag = 'internal scratch']
  %s0 = inlined_call_operand.vmem [shape: f32[2,8,128], index: 0, kind: input, shape index: {}]
  %s1 = inlined_call_operand.vmem [shape: f32[2,8,128], index: 1, kind: input, shape index: {}]
  %s2 = inlined_call_operand.vmem [shape: f32[16,128], index: 2, kind: input, shape index: {}]
  %s3 = inlined_call_operand.vmem [shape: f32[16,128], index: 3, kind: output, shape index: {}]
  %s4 = sld [smem:[#allocation0]]
  $region22: #{lsq_plus_act_quantizer_fwd.3} parent=0
    _
  %s6 = ssub.s32 1, %s4
  %s7 = scalar_select 0, %s6, %s4
  // Predicated region
  $region2: #{lsq_plus_act_quantizer_fwd.3} parent=0 // pred_check
    _
  $region3: #{lsq_plus_act_quantizer_fwd.3} parent=0 // pred_check_branch
    %9 = sbr.rel (0) target = $region5
  $region4: #{lsq_plus_act_quantizer_fwd.3} parent=0 // pred_region
    _
  $region5: #{lsq_plus_act_quantizer_fwd.3} parent=0 // pred_fallthru
    _
  // Predicated region
  $region6: #{lsq_plus_act_quantizer_fwd.3} parent=0 // pred_check
    _
  $region7: #{lsq_plus_act_quantizer_fwd.3} parent=0 // pred_check_branch
    %11 = sbr.rel (0) target = $region9
  $region8: #{lsq_plus_act_quantizer_fwd.3} parent=0 // pred_region
    _
  $region9: #{lsq_plus_act_quantizer_fwd.3} parent=0 // pred_fallthru
    _
  // Predicated region
  $region10: #{lsq_plus_act_quantizer_fwd.3} parent=0 // pred_check
    _
  $region11: #{lsq_plus_act_quantizer_fwd.3} parent=0 // pred_check_branch
    %13 = sbr.rel (0) target = $region13
  $region12: #{lsq_plus_act_quantizer_fwd.3} parent=0 // pred_region
    _
  $region13: #{lsq_plus_act_quantizer_fwd.3} parent=0 // pred_fallthru
    _
  %v14 = vld [vmem:[%s0] sm:$0xff]
  %v15 = vld [vmem:[%s0 + $0x8] sm:$0xff]
  %v16 = vmin.f32 %v14, %v15
  %17 = vmin.xlane.f32.xlu0 %v16
  %v18 = vpop.xlane.xlu0 %17
  %v19 = vrot.slane %v18, 4
  %v20 = vmin.f32 %v18, %v19
  %v21 = vrot.slane %v20, 2
  %v22 = vmin.f32 %v20, %v21
  %v23 = vrot.slane %v22, 1
  %v24 = vmin.f32 %v22, %v23
  %s25 = vtos %v24
  %v26 = vld [vmem:[%s1] sm:$0xff]
  %v27 = vld [vmem:[%s1 + $0x8] sm:$0xff]
  %v28 = vmax.f32 %v26, %v27
  %29 = vmax.xlane.f32.xlu0 %v28
  %v30 = vpop.xlane.xlu0 %29
  %v31 = vrot.slane %v30, 4
  %v32 = vmax.f32 %v30, %v31
  %v33 = vrot.slane %v32, 2
  %v34 = vmax.f32 %v32, %v33
  %v35 = vrot.slane %v34, 1
  %v36 = vmax.f32 %v34, %v35
  %s37 = vtos %v36
  %s38 = ssub.f32 %s37, %s25
  %v39 = vrcp.pop 255.0
  %s40 = vtos %v39
  %s41 = smul.f32 %s38, %s40
  %s42 = smul.f32 %s41, 0.0
  %s43 = ssub.f32 %s25, %s42
  %v44 = vstv %s41
  %v45 = vrcp.pop %v44
  %s46 = vtos %v45
  %v47 = vld [vmem:[%s2] sm:$0xff]
  %v48 = vld [vmem:[%s2 + $0x8] sm:$0xff]
  %v49 = vstv %s43
  %v50 = vsub.f32 %v47, %v49
  %v51 = vsub.f32 %v48, %v49
  %v52 = vstv %s46
  %v53 = vmul.f32 %v50, %v52
  %v54 = vmul.f32 %v51, %v52
  %v55 = vround.ne.pseudo %v53
  %v56 = vround.ne.pseudo %v54
  %v57 = vmax.f32 %v55, 0.0
  %v58 = vmax.f32 %v56, 0.0
  %v59 = vmin.f32 %v57, 255.0
  %v60 = vmin.f32 %v58, 255.0
  %v61 = vstv %s41
  %v62 = vmul.f32 %v59, %v61
  %v63 = vmul.f32 %v60, %v61
  %v64 = vadd.f32 %v62, %v49
  %v65 = vadd.f32 %v63, %v49
  %66 = vst [vmem:[%s3] sm:$0xff] %v64
  %67 = vst [vmem:[%s3 + $0x8] sm:$0xff] %v65
  // Predicated region
  $region14: #{lsq_plus_act_quantizer_fwd.3} parent=0 // pred_check
    _
  $region15: #{lsq_plus_act_quantizer_fwd.3} parent=0 // pred_check_branch
    %69 = sbr.rel (0) target = $region17
  $region16: #{lsq_plus_act_quantizer_fwd.3} parent=0 // pred_region
    _
  $region17: #{lsq_plus_act_quantizer_fwd.3} parent=0 // pred_fallthru
    _
  // Predicated region
  $region18: #{lsq_plus_act_quantizer_fwd.3} parent=0 // pred_check
    _
  $region19: #{lsq_plus_act_quantizer_fwd.3} parent=0 // pred_check_branch
    %71 = sbr.rel (0) target = $region21
  $region20: #{lsq_plus_act_quantizer_fwd.3} parent=0 // pred_region
    _
  $region21: #{lsq_plus_act_quantizer_fwd.3} parent=0 // pred_fallthru
    _

</llo_original>
